<compile_context>
chip_gen: v7x
topology: tpu7x:2x2x1
jax: 0.10.0
libtpu: 0.0.40
codegen_flags: <defaults>
</compile_context>

<pallas_src>
import functools

import jax
import jax.numpy as jnp
from jax import lax
from jax.experimental import pallas as pl
from jax.experimental.pallas import tpu as pltpu

EPS = 1e-5                     # epsilon added to the (unbiased) variance
_TEMP_BYTES = 1 << 20          # f32 compute-granule budget inside the kernel
_HW_CHUNK_MAX = 2048           # lanes per inner chunk (multiple of 128)


# --------------------------------------------------------------------------
# Planning helpers (all static Python ints at trace time)
# --------------------------------------------------------------------------
def _vmem_plan():
    """Returns (physical VMEM, streamed-block byte budget, scoped VMEM limit)."""
    try:
        cap = int(pltpu.get_tpu_info().vmem_capacity_bytes)
    except Exception:
        cap = 64 << 20                        # assume v7x (smallest per-TC VMEM)
    if cap >= (128 << 20):                    # v5e / v6e: 128 MiB physical
        return cap, 16 << 20, 64 << 20
    return cap, 12 << 20, 48 << 20            # v7x: 64 MiB physical per TC


def _pick_hw_chunk(hw):
    """Largest lane-aligned (x128) divisor of hw up to _HW_CHUNK_MAX, else hw."""
    if hw <= _HW_CHUNK_MAX:
        return hw
    for c in range(_HW_CHUNK_MAX, 127, -128):
        if hw % c == 0:
            return c
    return hw   # no lane-aligned divisor: accept one big chunk (rare, odd hw)


def _plan(nc, hw, itemsize):
    """Choose (tile_rows, row_chunk, hw_chunk, vmem_limit_bytes)."""
    cap, block_budget, vmem_limit = _vmem_plan()
    hw_chunk = _pick_hw_chunk(hw)
    # in-kernel f32 compute granule: row_chunk x hw_chunk x 4B  ~<= _TEMP_BYTES
    rc = max(8, (_TEMP_BYTES // max(1, hw_chunk * 4)) // 8 * 8)

    if nc <= 8:
        # block second-to-last dim must be a multiple of 8 OR the full dim
        tile_rows, rc = nc, nc
    else:
        rows = block_budget // max(1, hw * itemsize)
        rows = max(8, (int(rows) // 8) * 8)
        rows = min(rows, (nc // 8) * 8)
        # v7x megacore + DMA/compute overlap: keep >= 2 grid steps when possible
        if pl.cdiv(nc, rows) < 2:
            half = (((nc + 1) // 2) + 7) // 8 * 8
            rows = min(rows, max(8, half))
            rows = min(rows, (nc // 8) * 8)
        rc = min(rc, rows)
        rows = max(rc, (rows // rc) * rc)     # tile rows = multiple of row chunk
        tile_rows = rows

    # Raise the scoped limit if the double-buffered block needs it (large HW).
    needed = 2 * tile_rows * hw * itemsize + (8 << 20)
    if needed > vmem_limit:
        # TODO(synk): for HW so large that 8 full-HW rows cannot be
        # double-buffered in VMEM (e.g. ~1M f32 pixels per channel on v7x),
        # a 2-D grid over HW with streaming-moment accumulation is required.
        vmem_limit = min(needed, max(cap - (8 << 20), vmem_limit))
    return tile_rows, rc, hw_chunk, int(vmem_limit)


# --------------------------------------------------------------------------
# Kernel
# --------------------------------------------------------------------------
def _moments_kernel(x_ref, out_ref, *, hw, row_chunk, hw_chunk):
    """Per-row mean / std (unbiased var + EPS) of a (tile_rows, hw) block.

    x_ref   : (tile_rows, hw)  input rows, native dtype (cast per-granule to f32)
    out_ref : (tile_rows, 2)   f32 [mean, std] per row

    The streamed block is processed in (row_chunk, hw_chunk) f32 granules so
    VMEM temporaries stay small no matter how big the streamed block is.
    Two-pass numerics (mean first, then sum of squared deviations) preserved.
    """
    tile_rows = x_ref.shape[0]
    n_rc = tile_rows // row_chunk
    n_hc = hw // hw_chunk
    unroll_hw = min(n_hc, 8)

    inv_hw = jnp.float32(1.0 / hw)
    # torch.var default is unbiased (N-1); hw == 1 yields NaN, matching torch.
    inv_hwm1 = jnp.float32(1.0 / (hw - 1)) if hw > 1 else jnp.float32(float("nan"))

    def load(r0, c0):
        if n_rc == 1 and n_hc == 1:
            blk = x_ref[...]
        elif n_rc == 1:
            blk = x_ref[:, pl.ds(c0, hw_chunk)]
        elif n_hc == 1:
            blk = x_ref[pl.ds(r0, row_chunk), :]
        else:
            blk = x_ref[pl.ds(r0, row_chunk), pl.ds(c0, hw_chunk)]
        return blk.astype(jnp.float32)

    def process_rows(r0):
        if n_hc == 1:
            x = load(r0, 0)
            mean = jnp.sum(x, axis=-1, keepdims=True) * inv_hw
            d = x - mean
            sse = jnp.sum(d * d, axis=-1, keepdims=True)
        else:
            zero = jnp.zeros((row_chunk, 1), jnp.float32)

            def pass1(ci, acc):
                c0 = pl.multiple_of(ci * hw_chunk, 128)
                return acc + jnp.sum(load(r0, c0), axis=-1, keepdims=True)

            mean = lax.fori_loop(0, n_hc, pass1, zero, unroll=unroll_hw) * inv_hw

            def pass2(ci, acc):
                c0 = pl.multiple_of(ci * hw_chunk, 128)
                d = load(r0, c0) - mean
                return acc + jnp.sum(d * d, axis=-1, keepdims=True)

            sse = lax.fori_loop(0, n_hc, pass2, zero, unroll=unroll_hw)

        std = jnp.sqrt(sse * inv_hwm1 + EPS)
        ms = jnp.concatenate([mean, std], axis=-1)          # (row_chunk, 2)
        if n_rc == 1:
            out_ref[...] = ms
        else:
            out_ref[pl.ds(r0, row_chunk), :] = ms

    if n_rc == 1:
        process_rows(0)
    else:
        @pl.loop(0, n_rc)
        def _(j):
            process_rows(pl.multiple_of(j * row_chunk, 8))


# --------------------------------------------------------------------------
# Wrappers (forward-pass semantics of the PyTorch module)
# --------------------------------------------------------------------------
def compute_mean_std(x_nchw):
    """compute_i_th_moment(x, 1) and (x, 2): per-(n,c) mean and sqrt(var+eps)."""
    n, c, h, w = x_nchw.shape
    nc, hw = n * c, h * w
    x2 = x_nchw.reshape(nc, hw)            # free reshape; HW lands on the lane axis
    itemsize = jnp.dtype(x2.dtype).itemsize
    tile_rows, row_chunk, hw_chunk, vmem_limit = _plan(nc, hw, itemsize)
    g = pl.cdiv(nc, tile_rows)

    kernel = functools.partial(_moments_kernel, hw=hw,
                               row_chunk=row_chunk, hw_chunk=hw_chunk)
    moments = pl.pallas_call(
        kernel,
        out_shape=jax.ShapeDtypeStruct((nc, 2), jnp.float32),
        grid=(g,),
        in_specs=[pl.BlockSpec((tile_rows, hw), lambda i: (i, 0))],
        out_specs=pl.BlockSpec((tile_rows, 2), lambda i: (i, 0)),
        compiler_params=pltpu.CompilerParams(
            dimension_semantics=("parallel",),      # independent row tiles
            vmem_limit_bytes=vmem_limit),
        cost_estimate=pl.CostEstimate(
            flops=5 * nc * hw, transcendentals=nc,
            bytes_accessed=nc * hw * itemsize + nc * 2 * 4),
    )(x2)

    mean = moments[:, 0].reshape(n, c, 1, 1)
    std = moments[:, 1].reshape(n, c, 1, 1)
    return mean, std


def init_style_loss_mean_std(target_nchw):
    """Mirrors StyleLossMeanStd.__init__: fixed target moments (+ factors)."""
    tmean, tstd = compute_mean_std(target_nchw)
    # NOTE: matches PyTorch exactly; 1/mean(.) is numerically fragile if the
    # mean of a target moment is ~0 (documented assumption, no guard).
    mean_bf = jnp.minimum(1.0 / jnp.mean(tmean), jnp.float32(1.0))
    std_bf = jnp.minimum(1.0 / jnp.mean(tstd), jnp.float32(1.0))
    return tmean, tstd, mean_bf, std_bf


def style_loss_mean_std_forward(input_nchw, target_mean, target_std,
                                mean_bf, std_bf):
    """Forward pass: returns (input unchanged, scalar style loss)."""
    imean, istd = compute_mean_std(input_nchw)
    tm = target_mean.astype(jnp.float32)
    ts = target_std.astype(jnp.float32)
    loss = (mean_bf * jnp.mean((imean - tm) ** 2)
            + std_bf * jnp.mean((istd - ts) ** 2))
    return input_nchw, loss


# --------------------------------------------------------------------------
# Plain-JAX reference (mirrors the PyTorch semantics)
# --------------------------------------------------------------------------
def _reference_moments(x_nchw):
    n, c, h, w = x_nchw.shape
    v = x_nchw.reshape(n, c, h * w).astype(jnp.float32)
    mean = jnp.mean(v, axis=-1)
    d = v - mean[..., None]
    var = jnp.sum(d * d, axis=-1) / (h * w - 1) + EPS
    return mean.reshape(n, c, 1, 1), jnp.sqrt(var).reshape(n, c, 1, 1)


def _reference_loss(input_nchw, target_nchw):
    im, istd = _reference_moments(input_nchw)
    tm, tstd = _reference_moments(target_nchw)
    mbf = jnp.minimum(1.0 / jnp.mean(tm), 1.0)
    sbf = jnp.minimum(1.0 / jnp.mean(tstd), 1.0)
    return mbf * jnp.mean((im - tm) ** 2) + sbf * jnp.mean((istd - tstd) ** 2)


if __name__ == "__main__":
    key = jax.random.PRNGKey(0)
    k_in, k_tgt, k_a, k_b, k_c, k_d = jax.random.split(key, 6)

    # Primary small shape implied by the module: N=2, C=4, H=W=16.
    N, C, H, W = 2, 4, 16, 16
    x = jax.random.normal(k_in, (N, C, H, W), jnp.float32) * 0.5 + 0.3
    target = jax.random.normal(k_tgt, (N, C, H, W), jnp.float32) * 1.2 + 0.7

    # __init__-time precompute (target moments are fixed, never re-streamed).
    tmean, tstd, mean_bf, std_bf = init_style_loss_mean_std(target)

    out, loss = style_loss_mean_std_forward(x, tmean, tstd, mean_bf, std_bf)
    out = jax.block_until_ready(out)
    loss = jax.block_until_ready(loss)

    assert out.shape == x.shape and bool(jnp.all(out == x))   # returns input
    ref = _reference_loss(x, target)
    assert jnp.allclose(loss, ref, rtol=1e-5, atol=1e-6), (loss, ref)

    # Coverage: multi-tile grid with a ragged last row tile (nc = 120).
    a = jax.random.normal(k_a, (2, 60, 32, 32), jnp.float32)
    m, s = compute_mean_std(a)
    rm, rs = _reference_moments(a)
    assert jnp.allclose(m, rm, rtol=1e-5, atol=1e-6)
    assert jnp.allclose(s, rs, rtol=1e-5, atol=1e-6)

    # Coverage: HW-chunked inner loop (hw = 4096 > 2048).
    b = jax.random.normal(k_b, (1, 16, 64, 64), jnp.float32)
    m, s = compute_mean_std(b)
    rm, rs = _reference_moments(b)
    assert jnp.allclose(m, rm, rtol=1e-5, atol=1e-6)
    assert jnp.allclose(s, rs, rtol=1e-5, atol=1e-6)

    # Coverage: in-kernel row-chunk loop (tile_rows > row_chunk), hw = 2048.
    c_arr = jax.random.normal(k_c, (1, 512, 32, 64), jnp.float32)
    m, s = compute_mean_std(c_arr)
    rm, rs = _reference_moments(c_arr)
    assert jnp.allclose(m, rm, rtol=1e-5, atol=1e-6)
    assert jnp.allclose(s, rs, rtol=1e-5, atol=1e-6)

    # Coverage: both row- and HW-chunked (dynamic sublane + lane starts), bf16.
    d_arr = (jax.random.normal(k_d, (1, 256, 64, 64), jnp.float32)
             .astype(jnp.bfloat16))
    m, s = compute_mean_std(d_arr)
    rm, rs = _reference_moments(d_arr)          # reference on the same bf16 values
    assert jnp.allclose(m, rm, rtol=1e-4, atol=1e-5)
    assert jnp.allclose(s, rs, rtol=1e-4, atol=1e-5)

    print("KERNEL_OK")
</pallas_src>

<mosaic_0001>
module attributes {stable_mosaic.version = 11 : i64} {
  func.func @_moments_kernel(%arg0: i32, %arg1: memref<8x256xf32, #tpu.memory_space<vmem>>, %arg2: memref<8x2xf32, #tpu.memory_space<vmem>>) attributes {dimension_semantics = [#tpu.dimension_semantics<parallel>], iteration_bounds = array<i64: 1>, scalar_prefetch = 0 : i64, scratch_operands = 0 : i64, tpu.core_type = #tpu.core_type<tc>, window_params = [{transform_indices = @transform_0, window_bounds = array<i64: 8, 256>}, {transform_indices = @transform_1, window_bounds = array<i64: 8, 2>}]} {
    %c0 = arith.constant 0 : index
    %c0_0 = arith.constant 0 : index
    %0 = vector.load %arg1[%c0, %c0_0] : memref<8x256xf32, #tpu.memory_space<vmem>>, vector<8x256xf32>
    %cst = arith.constant dense<0.000000e+00> : vector<8xf32>
    %1 = vector.multi_reduction <add>, %0, %cst [1] : vector<8x256xf32> to vector<8xf32>
    %2 = vector.shape_cast %1 : vector<8xf32> to vector<8x1xf32>
    %cst_1 = arith.constant 3.906250e-03 : f32
    %3 = vector.broadcast %cst_1 : f32 to vector<8x1xf32>
    %4 = arith.mulf %2, %3 : vector<8x1xf32>
    %5 = vector.broadcast %4 : vector<8x1xf32> to vector<8x256xf32>
    %6 = arith.subf %0, %5 : vector<8x256xf32>
    %7 = arith.mulf %6, %6 : vector<8x256xf32>
    %cst_2 = arith.constant dense<0.000000e+00> : vector<8xf32>
    %8 = vector.multi_reduction <add>, %7, %cst_2 [1] : vector<8x256xf32> to vector<8xf32>
    %9 = vector.shape_cast %8 : vector<8xf32> to vector<8x1xf32>
    %cst_3 = arith.constant 0.00392156886 : f32
    %10 = vector.broadcast %cst_3 : f32 to vector<8x1xf32>
    %11 = arith.mulf %9, %10 : vector<8x1xf32>
    %cst_4 = arith.constant 9.99999974E-6 : f32
    %12 = vector.broadcast %cst_4 : f32 to vector<8x1xf32>
    %13 = arith.addf %11, %12 : vector<8x1xf32>
    %14 = math.sqrt %13 : vector<8x1xf32>
    %15 = tpu.concatenate %4, %14 in 1 : vector<8x1xf32>, vector<8x1xf32> -> vector<8x2xf32>
    %c0_5 = arith.constant 0 : index
    %c0_6 = arith.constant 0 : index
    %16 = vector.load %arg2[%c0_5, %c0_6] : memref<8x2xf32, #tpu.memory_space<vmem>>, vector<8x2xf32>
    tpu.vector_store %arg2[%c0_5, %c0_6], %15 {strides = array<i32>} : memref<8x2xf32, #tpu.memory_space<vmem>>, vector<8x2xf32>,
    return
  }
  func.func @transform_0(%arg0: i32) -> (i32, i32) {
    %c0_i32 = arith.constant 0 : i32
    %c0_i32_0 = arith.constant 0 : i32
    return %arg0, %c0_i32 : i32, i32
  }
  func.func @transform_1(%arg0: i32) -> (i32, i32) {
    %c0_i32 = arith.constant 0 : i32
    %c0_i32_0 = arith.constant 0 : i32
    return %arg0, %c0_i32 : i32, i32
  }
}

</mosaic_0001>

<llo_original>
// kernel: tpu_custom_call.1
$region0: #{tpu_custom_call.1}
  #allocation0 [shape = 'u32[]', space=smem, size = 0x4, offset = 0x4, fixed_abs, tag = 'smem constant byte address 0x4 - core index']
  #allocation1 [shape = 'u32[144,128]{1,0:T(1,128)}', space=vmem, size = 0x12000, scoped, tag = 'internal scratch']
  %s0 = inlined_call_operand.hbm [shape: f32[8,256], index: 0, kind: input, shape index: {}]
  %s1 = inlined_call_operand.vmem [shape: f32[8,2], index: 1, kind: output, shape index: {}]
  %s2 = sld [smem:[#allocation0]]
  $region18: #{tpu_custom_call.1} parent=0
    _
  %s4 = ssub.s32 1, %s2
  %s5 = scalar_select 0, %s4, %s2
  $region1: #{tpu_custom_call.1} parent=0
    #allocation2 [shape = 'u8[8192]{0}', space=vmem, size = 0x2000, scoped, tag = 'input window, operand 0, single buffered']
    #allocation3 [shape = 's32[1]{0}', space=sflag, size = 0x4, scoped, tag = 'scoped memory for tpu_custom_call.1']
    %6 = vsyncpa [#allocation3], 0
    // Predicated region
    $region2: #{tpu_custom_call.1} parent=1 // pred_check
      _
    $region3: #{tpu_custom_call.1} parent=1 // pred_check_branch
      %8 = sbr.rel (0) target = $region5
    $region4: #{tpu_custom_call.1} parent=1 // pred_region
      %s10 = ssub.s32 256, 256
      %11 = vsyncadd [#allocation3], %s10
      %s13 = sshll.u32 [#allocation2], 4
      %s14 = int_to_ptr.vmem [resolvable:$true] %s13
      %16 = dma.hbm_to_vmem [thread:$0]  %s0, 256, %s14, [#allocation3]
    $region5: #{tpu_custom_call.1} parent=1 // pred_fallthru
      _
    // Predicated region
    $region6: #{tpu_custom_call.1} parent=1 // pred_check
      _
    $region7: #{tpu_custom_call.1} parent=1 // pred_check_branch
      %18 = sbr.rel (0) target = $region9
    $region8: #{tpu_custom_call.1} parent=1 // pred_region
      %19 = dma.done [#allocation3], 256
    $region9: #{tpu_custom_call.1} parent=1 // pred_fallthru
      _
    %v20 = vld [vmem:[#allocation2] sm:$0xff]
    %v21 = vld [vmem:[#allocation2 + $0x8] sm:$0xff]
    %v22 = vadd.f32 %v20, %v21
    %23 = vadd.xlane.f32.xlu0 %v22
    %v24 = vpop.xlane.xlu0 %23
    %v25 = vmul.f32 %v24, 0.00390625
    %v26 = vsub.f32 %v20, %v25
    %v27 = vsub.f32 %v21, %v25
    %v28 = vmul.f32 %v26, %v26
    %v29 = vmul.f32 %v27, %v27
    %v30 = vadd.f32 %v28, %v29
    %31 = vadd.xlane.f32.xlu0 %v30
    %v32 = vpop.xlane.xlu0 %31
    %v33 = vmul.f32 %v32, 0.003921569
    %v34 = vadd.f32 %v33, 1e-05
    %v35 = vrsqrt.pop %v34
    %v36 = vmul.f32 %v34, %v35
    %vm37 = vcmp.eq.f32.partialorder %v34, inf
    %v38 = vsel %vm37, %v34, %v36
    %vm39 = vcmp.eq.f32.partialorder %v34, 0.0
    %v40 = vand.u32 %v34, 2147483648
    %v41 = vsel %vm39, %v40, %v38
    %vm42 = vcmask 7168
    %v43 = vsel %vm42, %v25, %v41
    %vm44 = vcmask 15360
    %45 = vst.msk [vmem:[%s1] sm:$0xff] %vm44, %v43
    // Predicated region
    $region10: #{tpu_custom_call.1} parent=1 // pred_check
      _
    $region11: #{tpu_custom_call.1} parent=1 // pred_check_branch
      %47 = sbr.rel (0) target = $region13
    $region12: #{tpu_custom_call.1} parent=1 // pred_region
      _
    $region13: #{tpu_custom_call.1} parent=1 // pred_fallthru
      _
    // Predicated region
    $region14: #{tpu_custom_call.1} parent=1 // pred_check
      _
    $region15: #{tpu_custom_call.1} parent=1 // pred_check_branch
      %49 = sbr.rel (0) target = $region17
    $region16: #{tpu_custom_call.1} parent=1 // pred_region
      _
    $region17: #{tpu_custom_call.1} parent=1 // pred_fallthru
      _
    %50 = vsyncpa [#allocation3], 1

</llo_original>
